<compile_context>
chip_gen: v7x
topology: tpu7x:2x2x1
jax: 0.10.0
libtpu: 0.0.40
codegen_flags: <defaults>
</compile_context>

<pallas_src>
import math
import functools

import jax
import jax.numpy as jnp
from jax import lax
from jax.experimental import pallas as pl
from jax.experimental.pallas import tpu as pltpu


def _round_up(n, m):
    return ((n + m - 1) // m) * m


def _cdiv(a, b):
    return -(-a // b)


# ----------------------------- kernels --------------------------------------


def _l1_fused_lrelu(x_ref, w1_ref, b1_ref, *, scale1, lr_mul, neg_slope, act_scale):
    # MXU matmul in compute_dtype, f32 accumulate; scale+bias fused into one VPU pass.
    h = jnp.dot(x_ref[...], w1_ref[...], preferred_element_type=jnp.float32)   # [TM, H]
    h = h * jnp.float32(scale1) + b1_ref[...] * jnp.float32(lr_mul)
    return jnp.where(h >= 0, h, jnp.float32(neg_slope) * h) * jnp.float32(act_scale)


def _kernel_uncond(x_ref, w1_ref, b1_ref, w2_ref, b2_ref, d_ref, *,
                   scale1, scale2, lr_mul, neg_slope, act_scale):
    # x:[TM,F] w1:[F,H] b1:[1,H] w2:[1,H] b2:[1,1](SMEM) d:[TM,1]
    h = _l1_fused_lrelu(x_ref, w1_ref, b1_ref, scale1=scale1, lr_mul=lr_mul,
                        neg_slope=neg_slope, act_scale=act_scale)
    v = w2_ref[...] * jnp.float32(scale2)                                       # [1, H]
    d = jnp.sum(h * v, axis=-1, keepdims=True)                                  # [TM, 1]
    d_ref[...] = (d + b2_ref[0, 0] * jnp.float32(lr_mul)).astype(d_ref.dtype)


def _kernel_cond_onehot(x_ref, w1_ref, b1_ref, w2_ref, b2_ref, y_ref, emb_ref, d_ref, *,
                        scale1, scale2, lr_mul, neg_slope, act_scale):
    # In-kernel embedding gather: wy = onehot(y) @ emb on the (otherwise idle) MXU.
    # x:[TM,F] y:[TM,1] int32  emb:[NCp,H] f32 (resident)  d:[TM,1]
    h = _l1_fused_lrelu(x_ref, w1_ref, b1_ref, scale1=scale1, lr_mul=lr_mul,
                        neg_slope=neg_slope, act_scale=act_scale)
    tm = y_ref.shape[0]
    ncp = emb_ref.shape[0]
    ids = y_ref[...]                                                            # [TM, 1]
    cls = lax.broadcasted_iota(jnp.int32, (tm, ncp), 1)                         # [TM, NCp]
    onehot = (ids == cls).astype(jnp.float32)                                   # [TM, NCp]
    wy = jnp.dot(onehot, emb_ref[...], preferred_element_type=jnp.float32)      # [TM, H]
    # Fused l2 + projection: h @ (w2*scale2).T + sum(h*wy) == sum(h*(w2*scale2 + wy))
    v = w2_ref[...] * jnp.float32(scale2) + wy                                  # [TM, H]
    d = jnp.sum(h * v, axis=-1, keepdims=True)                                  # [TM, 1]
    d_ref[...] = (d + b2_ref[0, 0] * jnp.float32(lr_mul)).astype(d_ref.dtype)


def _kernel_cond_gather(x_ref, w1_ref, b1_ref, w2_ref, b2_ref, wy_ref, d_ref, *,
                        scale1, scale2, lr_mul, neg_slope, act_scale):
    # Fallback (very large class counts): w_y pre-gathered in the wrapper, streamed per tile.
    h = _l1_fused_lrelu(x_ref, w1_ref, b1_ref, scale1=scale1, lr_mul=lr_mul,
                        neg_slope=neg_slope, act_scale=act_scale)
    v = w2_ref[...] * jnp.float32(scale2) + wy_ref[...].astype(jnp.float32)     # [TM, H]
    d = jnp.sum(h * v, axis=-1, keepdims=True)                                  # [TM, 1]
    d_ref[...] = (d + b2_ref[0, 0] * jnp.float32(lr_mul)).astype(d_ref.dtype)


# ----------------------------- wrapper ---------------------------------------


def style_tiny_discriminator(params, x, y=None, *, compute_dtype=jnp.bfloat16, tile_m=None):
    """Forward pass.

    x: [B, n_features]; y: [B] int or None.
    compute_dtype: dtype of the dominant x / w1 MXU streams (default bf16 — the
      kernel is HBM-bandwidth bound on x, so this is ~2x; pass jnp.float32 for
      bit-faithful numerics). All post-matmul math is f32 either way.
    tile_m: optional cap on batch-tile rows (defaults: 2048 f32, 4096 bf16).
    """
    w1 = params["w1"]           # [H, F]  (torch layout: out, in)
    b1 = params["b1"]           # [H]
    w2 = params["w2"]           # [1, H]
    b2 = params["b2"]           # [1]
    emb = params.get("emb")     # [n_classes, d_hidden]  (d_hidden must equal H)

    B, F = x.shape
    H = w1.shape[0]
    lr_mul = 1.0
    scale1 = (1.0 / math.sqrt(F)) * lr_mul
    scale2 = (1.0 / math.sqrt(H)) * lr_mul

    cdt = jnp.dtype(compute_dtype) if compute_dtype is not None else jnp.dtype(x.dtype)
    itemsize = cdt.itemsize

    # --- batch tiling: minimal padding, even tile counts for megacore (v7x) ---
    tm_cap = int(tile_m) if tile_m is not None else (4096 if itemsize <= 2 else 2048)
    sub = 8 if itemsize >= 4 else 16
    n_tiles = max(1, _cdiv(B, tm_cap))
    if n_tiles % 2 == 1 and B >= 1024:     # give v7x's second TensorCore a tile
        n_tiles += 1
    TM = _round_up(_cdiv(B, n_tiles), sub)
    B_pad = n_tiles * TM

    # --- glue: dtype casts, layout, padding (cheap relative to the kernel) ---
    x_c = x.astype(cdt)
    if B_pad != B:
        x_c = jnp.pad(x_c, ((0, B_pad - B), (0, 0)))
    w1_t = jnp.transpose(w1).astype(cdt)                      # [F, H] for plain x @ W
    b1_2d = b1.reshape(1, H).astype(jnp.float32)
    w2_row = w2.reshape(1, H).astype(jnp.float32)
    b2_2d = b2.reshape(1, 1).astype(jnp.float32)

    kwargs = dict(scale1=scale1, scale2=scale2, lr_mul=lr_mul,
                  neg_slope=0.2, act_scale=math.sqrt(2.0))

    x_spec = pl.BlockSpec((TM, F), lambda i: (i, 0))
    out_spec = pl.BlockSpec((TM, 1), lambda i: (i, 0))
    b2_spec = pl.BlockSpec(memory_space=pltpu.MemorySpace.SMEM)   # scalar path
    out_shape = jax.ShapeDtypeStruct((B_pad, 1), jnp.float32)
    cparams = pltpu.CompilerParams(
        dimension_semantics=(pltpu.PARALLEL,),
        vmem_limit_bytes=32 * 1024 * 1024,
    )

    def const_spec(shape, mode):
        # Constant-index blocks: resident across grid steps; Buffered(1) = single buffer.
        if mode is None:
            return pl.BlockSpec(shape, lambda i: (0, 0))
        return pl.BlockSpec(shape, lambda i: (0, 0), pipeline_mode=mode)

    def run(mode):
        w1_spec = const_spec((F, H), mode)
        b1_spec = const_spec((1, H), mode)
        w2_spec = const_spec((1, H), mode)

        if y is None:
            return pl.pallas_call(
                functools.partial(_kernel_uncond, **kwargs),
                out_shape=out_shape, grid=(n_tiles,),
                in_specs=[x_spec, w1_spec, b1_spec, w2_spec, b2_spec],
                out_specs=out_spec, compiler_params=cparams,
            )(x_c, w1_t, b1_2d, w2_row, b2_2d)

        NC = emb.shape[0]
        if NC <= 256:
            # Keep the tiny class table resident; gather per tile in-kernel via one-hot matmul.
            NCp = _round_up(NC, 128)
            emb_pad = jnp.pad(emb.astype(jnp.float32), ((0, NCp - NC), (0, 0)))
            y_col = y.astype(jnp.int32).reshape(B, 1)
            if B_pad != B:
                y_col = jnp.pad(y_col, ((0, B_pad - B), (0, 0)))
            y_spec = pl.BlockSpec((TM, 1), lambda i: (i, 0))
            emb_spec = const_spec((NCp, H), mode)
            return pl.pallas_call(
                functools.partial(_kernel_cond_onehot, **kwargs),
                out_shape=out_shape, grid=(n_tiles,),
                in_specs=[x_spec, w1_spec, b1_spec, w2_spec, b2_spec, y_spec, emb_spec],
                out_specs=out_spec, compiler_params=cparams,
            )(x_c, w1_t, b1_2d, w2_row, b2_2d, y_col, emb_pad)

        # Large class count: gather rows in the wrapper and stream them per tile.
        w_y = jnp.take(emb, y, axis=0).astype(cdt)            # [B, H]
        if B_pad != B:
            w_y = jnp.pad(w_y, ((0, B_pad - B), (0, 0)))
        wy_spec = pl.BlockSpec((TM, H), lambda i: (i, 0))
        return pl.pallas_call(
            functools.partial(_kernel_cond_gather, **kwargs),
            out_shape=out_shape, grid=(n_tiles,),
            in_specs=[x_spec, w1_spec, b1_spec, w2_spec, b2_spec, wy_spec],
            out_specs=out_spec, compiler_params=cparams,
        )(x_c, w1_t, b1_2d, w2_row, b2_2d, w_y)

    try:
        out = run(pl.Buffered(1))          # single resident buffer for constant weight blocks
    except Exception:                      # pipeline_mode unsupported -> default double buffering
        out = run(None)

    return out[:B] if B_pad != B else out


# ----------------------------- reference & test ------------------------------


def reference(params, x, y=None):
    """Pure-JAX f32 reference implementing the PyTorch forward exactly."""
    B, F = x.shape
    H = params["w1"].shape[0]
    scale1 = 1.0 / math.sqrt(F)
    scale2 = 1.0 / math.sqrt(H)
    x = x.astype(jnp.float32)
    h = x @ (params["w1"] * scale1).T
    h = jnp.where(h + params["b1"] >= 0,
                  h + params["b1"],
                  0.2 * (h + params["b1"])) * math.sqrt(2.0)
    d = h @ (params["w2"] * scale2).T + params["b2"]
    if y is not None:
        w_y = params["emb"][y]
        d = d + jnp.sum(h * w_y, axis=1, keepdims=True)
    return d


if __name__ == "__main__":
    # Small shapes consistent with the module: d_hidden must equal n_features // 16
    # for the projection term to be well-formed (as in the PyTorch module's usage).
    B = 8
    n_features = 512
    H = n_features // 16          # 32
    d_hidden = H                  # 32
    n_classes = 4

    key = jax.random.PRNGKey(0)
    k_x, k_w1, k_w2, k_emb, k_y = jax.random.split(key, 5)

    params = {
        "w1": jax.random.normal(k_w1, (H, n_features), jnp.float32),   # torch.randn(out,in)/lr_mul
        "b1": jnp.zeros((H,), jnp.float32),                             # bias_init = 0
        "w2": jax.random.normal(k_w2, (1, H), jnp.float32),
        "b2": jnp.zeros((1,), jnp.float32),
        "emb": jax.random.normal(k_emb, (n_classes, d_hidden), jnp.float32),
    }

    x = jax.random.normal(k_x, (B, n_features), jnp.float32)
    y = jax.random.randint(k_y, (B,), 0, n_classes, jnp.int32)

    # 1) Conditional path, f32 compute (bit-faithful numerics vs reference).
    d = style_tiny_discriminator(params, x, y, compute_dtype=jnp.float32)
    jax.block_until_ready(d)
    d_ref = reference(params, x, y)
    assert d.shape == (B, 1)
    assert jnp.allclose(d, d_ref, atol=1e-3, rtol=1e-3), (d, d_ref)

    # 2) Unconditional path (y=None), f32 compute.
    d0 = style_tiny_discriminator(params, x, None, compute_dtype=jnp.float32)
    jax.block_until_ready(d0)
    d0_ref = reference(params, x, None)
    assert jnp.allclose(d0, d0_ref, atol=1e-3, rtol=1e-3), (d0, d0_ref)

    # 3) Default bf16 compute path (recommended for speed) — looser tolerance vs f32 ref.
    d_bf = style_tiny_discriminator(params, x, y)
    jax.block_until_ready(d_bf)
    assert jnp.allclose(d_bf, d_ref, atol=0.25, rtol=0.05), (d_bf, d_ref)

    # 4) Larger, non-multiple batch exercising the grid, minimal padding, resident weights.
    B2 = 37
    x2 = jax.random.normal(jax.random.PRNGKey(1), (B2, n_features), jnp.float32)
    y2 = jax.random.randint(jax.random.PRNGKey(2), (B2,), 0, n_classes, jnp.int32)
    d2 = style_tiny_discriminator(params, x2, y2, compute_dtype=jnp.float32, tile_m=16)
    jax.block_until_ready(d2)
    d2_ref = reference(params, x2, y2)
    assert d2.shape == (B2, 1)
    assert jnp.allclose(d2, d2_ref, atol=1e-3, rtol=1e-3), (d2, d2_ref)

    print("KERNEL_OK")
</pallas_src>

<mosaic_0001>
module attributes {stable_mosaic.version = 11 : i64} {
  func.func @_kernel_cond_onehot(%arg0: i32, %arg1: memref<8x512xf32, #tpu.memory_space<vmem>>, %arg2: memref<512x32xf32, #tpu.memory_space<vmem>>, %arg3: memref<1x32xf32, #tpu.memory_space<vmem>>, %arg4: memref<1x32xf32, #tpu.memory_space<vmem>>, %arg5: memref<1x1xf32, #tpu.memory_space<smem>>, %arg6: memref<8x1xi32, #tpu.memory_space<vmem>>, %arg7: memref<128x32xf32, #tpu.memory_space<vmem>>, %arg8: memref<8x1xf32, #tpu.memory_space<vmem>>) attributes {dimension_semantics = [#tpu.dimension_semantics<parallel>], iteration_bounds = array<i64: 1>, scalar_prefetch = 0 : i64, scratch_operands = 0 : i64, tpu.core_type = #tpu.core_type<tc>, window_params = [{transform_indices = @transform_0, window_bounds = array<i64: 8, 512>}, {pipeline_mode = #tpu.pipeline_mode<synchronous>, transform_indices = @transform_1, window_bounds = array<i64: 512, 32>}, {pipeline_mode = #tpu.pipeline_mode<synchronous>, transform_indices = @transform_2, window_bounds = array<i64: 1, 32>}, {pipeline_mode = #tpu.pipeline_mode<synchronous>, transform_indices = @transform_3, window_bounds = array<i64: 1, 32>}, {transform_indices = @transform_4, window_bounds = array<i64: 1, 1>}, {transform_indices = @transform_5, window_bounds = array<i64: 8, 1>}, {pipeline_mode = #tpu.pipeline_mode<synchronous>, transform_indices = @transform_6, window_bounds = array<i64: 128, 32>}, {transform_indices = @transform_7, window_bounds = array<i64: 8, 1>}]} {
    %c0 = arith.constant 0 : index
    %c0_0 = arith.constant 0 : index
    %0 = vector.load %arg1[%c0, %c0_0] : memref<8x512xf32, #tpu.memory_space<vmem>>, vector<8x512xf32>
    %c0_1 = arith.constant 0 : index
    %c0_2 = arith.constant 0 : index
    %1 = vector.load %arg2[%c0_1, %c0_2] : memref<512x32xf32, #tpu.memory_space<vmem>>, vector<512x32xf32>
    %cst = arith.constant dense<0.000000e+00> : vector<8x32xf32>
    %2 = tpu.matmul %0, %1, %cst {dimension_numbers = #tpu.dot_dimension_numbers<[1], [0], [0], [1], [0, 0, 1, 1], [], []>} : vector<8x512xf32>, vector<512x32xf32>, vector<8x32xf32> -> vector<8x32xf32>
    %cst_3 = arith.constant 0.0441941731 : f32
    %3 = vector.broadcast %cst_3 : f32 to vector<8x32xf32>
    %4 = arith.mulf %2, %3 : vector<8x32xf32>
    %c0_4 = arith.constant 0 : index
    %c0_5 = arith.constant 0 : index
    %5 = vector.load %arg3[%c0_4, %c0_5] : memref<1x32xf32, #tpu.memory_space<vmem>>, vector<1x32xf32>
    %cst_6 = arith.constant 1.000000e+00 : f32
    %6 = vector.broadcast %cst_6 : f32 to vector<1x32xf32>
    %7 = arith.mulf %5, %6 : vector<1x32xf32>
    %8 = vector.broadcast %7 : vector<1x32xf32> to vector<8x32xf32>
    %9 = arith.addf %4, %8 : vector<8x32xf32>
    %cst_7 = arith.constant 0.000000e+00 : f32
    %10 = vector.broadcast %cst_7 : f32 to vector<8x32xf32>
    %11 = arith.cmpf oge, %9, %10 : vector<8x32xf32>
    %cst_8 = arith.constant 2.000000e-01 : f32
    %12 = vector.broadcast %cst_8 : f32 to vector<8x32xf32>
    %13 = arith.mulf %12, %9 : vector<8x32xf32>
    %14 = arith.select %11, %9, %13 : vector<8x32xi1>, vector<8x32xf32>
    %cst_9 = arith.constant 1.41421354 : f32
    %15 = vector.broadcast %cst_9 : f32 to vector<8x32xf32>
    %16 = arith.mulf %14, %15 : vector<8x32xf32>
    %c0_10 = arith.constant 0 : index
    %c0_11 = arith.constant 0 : index
    %17 = vector.load %arg6[%c0_10, %c0_11] : memref<8x1xi32, #tpu.memory_space<vmem>>, vector<8x1xi32>
    %18 = tpu.iota {dimensions = array<i32: 1>} : vector<8x128xi32>
    %19 = vector.broadcast %17 : vector<8x1xi32> to vector<8x128xi32>
    %20 = arith.cmpi eq, %19, %18 : vector<8x128xi32>
    %21 = arith.extui %20 : vector<8x128xi1> to vector<8x128xi32>
    %22 = arith.sitofp %21 : vector<8x128xi32> to vector<8x128xf32>
    %c0_12 = arith.constant 0 : index
    %c0_13 = arith.constant 0 : index
    %23 = vector.load %arg7[%c0_12, %c0_13] : memref<128x32xf32, #tpu.memory_space<vmem>>, vector<128x32xf32>
    %cst_14 = arith.constant dense<0.000000e+00> : vector<8x32xf32>
    %24 = tpu.matmul %22, %23, %cst_14 {dimension_numbers = #tpu.dot_dimension_numbers<[1], [0], [0], [1], [0, 0, 1, 1], [], []>} : vector<8x128xf32>, vector<128x32xf32>, vector<8x32xf32> -> vector<8x32xf32>
    %c0_15 = arith.constant 0 : index
    %c0_16 = arith.constant 0 : index
    %25 = vector.load %arg4[%c0_15, %c0_16] : memref<1x32xf32, #tpu.memory_space<vmem>>, vector<1x32xf32>
    %cst_17 = arith.constant 0.176776692 : f32
    %26 = vector.broadcast %cst_17 : f32 to vector<1x32xf32>
    %27 = arith.mulf %25, %26 : vector<1x32xf32>
    %28 = vector.broadcast %27 : vector<1x32xf32> to vector<8x32xf32>
    %29 = arith.addf %28, %24 : vector<8x32xf32>
    %30 = arith.mulf %16, %29 : vector<8x32xf32>
    %cst_18 = arith.constant dense<0.000000e+00> : vector<8xf32>
    %31 = vector.multi_reduction <add>, %30, %cst_18 [1] : vector<8x32xf32> to vector<8xf32>
    %32 = vector.shape_cast %31 : vector<8xf32> to vector<8x1xf32>
    %c0_19 = arith.constant 0 : index
    %c0_20 = arith.constant 0 : index
    %33 = memref.load %arg5[%c0_19, %c0_20] : memref<1x1xf32, #tpu.memory_space<smem>>
    %cst_21 = arith.constant 1.000000e+00 : f32
    %34 = arith.mulf %33, %cst_21 : f32
    %35 = vector.broadcast %34 : f32 to vector<8x1xf32>
    %36 = arith.addf %32, %35 : vector<8x1xf32>
    %c0_22 = arith.constant 0 : index
    %c0_23 = arith.constant 0 : index
    %37 = vector.load %arg8[%c0_22, %c0_23] : memref<8x1xf32, #tpu.memory_space<vmem>>, vector<8x1xf32>
    tpu.vector_store %arg8[%c0_22, %c0_23], %36 {strides = array<i32>} : memref<8x1xf32, #tpu.memory_space<vmem>>, vector<8x1xf32>,
    return
  }
  func.func @transform_0(%arg0: i32) -> (i32, i32) {
    %c0_i32 = arith.constant 0 : i32
    %c0_i32_0 = arith.constant 0 : i32
    return %arg0, %c0_i32 : i32, i32
  }
  func.func @transform_1(%arg0: i32) -> (i32, i32) {
    %c0_i32 = arith.constant 0 : i32
    %c0_i32_0 = arith.constant 0 : i32
    %c0_i32_1 = arith.constant 0 : i32
    return %c0_i32, %c0_i32_0 : i32, i32
  }
  func.func @transform_2(%arg0: i32) -> (i32, i32) {
    %c0_i32 = arith.constant 0 : i32
    %c0_i32_0 = arith.constant 0 : i32
    %c0_i32_1 = arith.constant 0 : i32
    return %c0_i32, %c0_i32_0 : i32, i32
  }
  func.func @transform_3(%arg0: i32) -> (i32, i32) {
    %c0_i32 = arith.constant 0 : i32
    %c0_i32_0 = arith.constant 0 : i32
    %c0_i32_1 = arith.constant 0 : i32
    return %c0_i32, %c0_i32_0 : i32, i32
  }
  func.func @transform_4(%arg0: i32) -> (i32, i32) {
    %c0_i32 = arith.constant 0 : i32
    %c0_i32_0 = arith.constant 0 : i32
    %c0_i32_1 = arith.constant 0 : i32
    return %c0_i32, %c0_i32_0 : i32, i32
  }
  func.func @transform_5(%arg0: i32) -> (i32, i32) {
    %c0_i32 = arith.constant 0 : i32
    %c0_i32_0 = arith.constant 0 : i32
    return %arg0, %c0_i32 : i32, i32
  }
  func.func @transform_6(%arg0: i32) -> (i32, i32) {
    %c0_i32 = arith.constant 0 : i32
    %c0_i32_0 = arith.constant 0 : i32
    %c0_i32_1 = arith.constant 0 : i32
    return %c0_i32, %c0_i32_0 : i32, i32
  }
  func.func @transform_7(%arg0: i32) -> (i32, i32) {
    %c0_i32 = arith.constant 0 : i32
    %c0_i32_0 = arith.constant 0 : i32
    return %arg0, %c0_i32 : i32, i32
  }
}

module attributes {stable_mosaic.version = 11 : i64} {
  func.func @_kernel_cond_onehot(%arg0: i32, %arg1: memref<8x512xf32, #tpu.memory_space<vmem>>, %arg2: memref<512x32xf32, #tpu.memory_space<vmem>>, %arg3: memref<1x32xf32, #tpu.memory_space<vmem>>, %arg4: memref<1x32xf32, #tpu.memory_space<vmem>>, %arg5: memref<1x1xf32, #tpu.memory_space<smem>>, %arg6: memref<8x1xi32, #tpu.memory_space<vmem>>, %arg7: memref<128x32xf32, #tpu.memory_space<vmem>>, %arg8: memref<8x1xf32, #tpu.memory_space<vmem>>) attributes {dimension_semantics = [#tpu.dimension_semantics<parallel>], iteration_bounds = array<i64: 1>, scalar_prefetch = 0 : i64, scratch_operands = 0 : i64, tpu.core_type = #tpu.core_type<tc>, window_params = [{transform_indices = @transform_0, window_bounds = array<i64: 8, 512>}, {pipeline_mode = #tpu.pipeline_mode<synchronous>, transform_indices = @transform_1, window_bounds = array<i64: 512, 32>}, {pipeline_mode = #tpu.pipeline_mode<synchronous>, transform_indices = @transform_2, window_bounds = array<i64: 1, 32>}, {pipeline_mode = #tpu.pipeline_mode<synchronous>, transform_indices = @transform_3, window_bounds = array<i64: 1, 32>}, {transform_indices = @transform_4, window_bounds = array<i64: 1, 1>}, {transform_indices = @transform_5, window_bounds = array<i64: 8, 1>}, {pipeline_mode = #tpu.pipeline_mode<synchronous>, transform_indices = @transform_6, window_bounds = array<i64: 128, 32>}, {transform_indices = @transform_7, window_bounds = array<i64: 8, 1>}]} {
    %c0 = arith.constant 0 : index
    %c0_0 = arith.constant 0 : index
    %0 = vector.load %arg1[%c0, %c0_0] : memref<8x512xf32, #tpu.memory_space<vmem>>, vector<8x512xf32>
    %c0_1 = arith.constant 0 : index
    %c0_2 = arith.constant 0 : index
    %1 = vector.load %arg2[%c0_1, %c0_2] : memref<512x32xf32, #tpu.memory_space<vmem>>, vector<512x32xf32>
    %cst = arith.constant dense<0.000000e+00> : vector<8x32xf32>
    %2 = tpu.matmul %0, %1, %cst {dimension_numbers = #tpu.dot_dimension_numbers<[1], [0], [0], [1], [0, 0, 1, 1], [], []>} : vector<8x512xf32>, vector<512x32xf32>, vector<8x32xf32> -> vector<8x32xf32>
    %cst_3 = arith.constant 0.0441941731 : f32
    %3 = vector.broadcast %cst_3 : f32 to vector<8x32xf32>
    %4 = arith.mulf %2, %3 : vector<8x32xf32>
    %c0_4 = arith.constant 0 : index
    %c0_5 = arith.constant 0 : index
    %5 = vector.load %arg3[%c0_4, %c0_5] : memref<1x32xf32, #tpu.memory_space<vmem>>, vector<1x32xf32>
    %cst_6 = arith.constant 1.000000e+00 : f32
    %6 = vector.broadcast %cst_6 : f32 to vector<1x32xf32>
    %7 = arith.mulf %5, %6 : vector<1x32xf32>
    %8 = vector.broadcast %7 : vector<1x32xf32> to vector<8x32xf32>
    %9 = arith.addf %4, %8 : vector<8x32xf32>
    %cst_7 = arith.constant 0.000000e+00 : f32
    %10 = vector.broadcast %cst_7 : f32 to vector<8x32xf32>
    %11 = arith.cmpf oge, %9, %10 : vector<8x32xf32>
    %cst_8 = arith.constant 2.000000e-01 : f32
    %12 = vector.broadcast %cst_8 : f32 to vector<8x32xf32>
    %13 = arith.mulf %12, %9 : vector<8x32xf32>
    %14 = arith.select %11, %9, %13 : vector<8x32xi1>, vector<8x32xf32>
    %cst_9 = arith.constant 1.41421354 : f32
    %15 = vector.broadcast %cst_9 : f32 to vector<8x32xf32>
    %16 = arith.mulf %14, %15 : vector<8x32xf32>
    %c0_10 = arith.constant 0 : index
    %c0_11 = arith.constant 0 : index
    %17 = vector.load %arg6[%c0_10, %c0_11] : memref<8x1xi32, #tpu.memory_space<vmem>>, vector<8x1xi32>
    %18 = tpu.iota {dimensions = array<i32: 1>} : vector<8x128xi32>
    %19 = vector.broadcast %17 : vector<8x1xi32> to vector<8x128xi32>
    %20 = arith.cmpi eq, %19, %18 : vector<8x128xi32>
    %21 = arith.extui %20 : vector<8x128xi1> to vector<8x128xi32>
    %22 = arith.sitofp %21 : vector<8x128xi32> to vector<8x128xf32>
    %c0_12 = arith.constant 0 : index
    %c0_13 = arith.constant 0 : index
    %23 = vector.load %arg7[%c0_12, %c0_13] : memref<128x32xf32, #tpu.memory_space<vmem>>, vector<128x32xf32>
    %cst_14 = arith.constant dense<0.000000e+00> : vector<8x32xf32>
    %24 = tpu.matmul %22, %23, %cst_14 {dimension_numbers = #tpu.dot_dimension_numbers<[1], [0], [0], [1], [0, 0, 1, 1], [], []>} : vector<8x128xf32>, vector<128x32xf32>, vector<8x32xf32> -> vector<8x32xf32>
    %c0_15 = arith.constant 0 : index
    %c0_16 = arith.constant 0 : index
    %25 = vector.load %arg4[%c0_15, %c0_16] : memref<1x32xf32, #tpu.memory_space<vmem>>, vector<1x32xf32>
    %cst_17 = arith.constant 0.176776692 : f32
    %26 = vector.broadcast %cst_17 : f32 to vector<1x32xf32>
    %27 = arith.mulf %25, %26 : vector<1x32xf32>
    %28 = vector.broadcast %27 : vector<1x32xf32> to vector<8x32xf32>
    %29 = arith.addf %28, %24 : vector<8x32xf32>
    %30 = arith.mulf %16, %29 : vector<8x32xf32>
    %cst_18 = arith.constant dense<0.000000e+00> : vector<8xf32>
    %31 = vector.multi_reduction <add>, %30, %cst_18 [1] : vector<8x32xf32> to vector<8xf32>
    %32 = vector.shape_cast %31 : vector<8xf32> to vector<8x1xf32>
    %c0_19 = arith.constant 0 : index
    %c0_20 = arith.constant 0 : index
    %33 = memref.load %arg5[%c0_19, %c0_20] : memref<1x1xf32, #tpu.memory_space<smem>>
    %cst_21 = arith.constant 1.000000e+00 : f32
    %34 = arith.mulf %33, %cst_21 : f32
    %35 = vector.broadcast %34 : f32 to vector<8x1xf32>
    %36 = arith.addf %32, %35 : vector<8x1xf32>
    %c0_22 = arith.constant 0 : index
    %c0_23 = arith.constant 0 : index
    %37 = vector.load %arg8[%c0_22, %c0_23] : memref<8x1xf32, #tpu.memory_space<vmem>>, vector<8x1xf32>
    tpu.vector_store %arg8[%c0_22, %c0_23], %36 {strides = array<i32>} : memref<8x1xf32, #tpu.memory_space<vmem>>, vector<8x1xf32>,
    return
  }
  func.func @transform_0(%arg0: i32) -> (i32, i32) {
    %c0_i32 = arith.constant 0 : i32
    %c0_i32_0 = arith.constant 0 : i32
    return %arg0, %c0_i32 : i32, i32
  }
  func.func @transform_1(%arg0: i32) -> (i32, i32) {
    %c0_i32 = arith.constant 0 : i32
    %c0_i32_0 = arith.constant 0 : i32
    %c0_i32_1 = arith.constant 0 : i32
    return %c0_i32, %c0_i32_0 : i32, i32
  }
  func.func @transform_2(%arg0: i32) -> (i32, i32) {
    %c0_i32 = arith.constant 0 : i32
    %c0_i32_0 = arith.constant 0 : i32
    %c0_i32_1 = arith.constant 0 : i32
    return %c0_i32, %c0_i32_0 : i32, i32
  }
  func.func @transform_3(%arg0: i32) -> (i32, i32) {
    %c0_i32 = arith.constant 0 : i32
    %c0_i32_0 = arith.constant 0 : i32
    %c0_i32_1 = arith.constant 0 : i32
    return %c0_i32, %c0_i32_0 : i32, i32
  }
  func.func @transform_4(%arg0: i32) -> (i32, i32) {
    %c0_i32 = arith.constant 0 : i32
    %c0_i32_0 = arith.constant 0 : i32
    %c0_i32_1 = arith.constant 0 : i32
    return %c0_i32, %c0_i32_0 : i32, i32
  }
  func.func @transform_5(%arg0: i32) -> (i32, i32) {
    %c0_i32 = arith.constant 0 : i32
    %c0_i32_0 = arith.constant 0 : i32
    return %arg0, %c0_i32 : i32, i32
  }
  func.func @transform_6(%arg0: i32) -> (i32, i32) {
    %c0_i32 = arith.constant 0 : i32
    %c0_i32_0 = arith.constant 0 : i32
    %c0_i32_1 = arith.constant 0 : i32
    return %c0_i32, %c0_i32_0 : i32, i32
  }
  func.func @transform_7(%arg0: i32) -> (i32, i32) {
    %c0_i32 = arith.constant 0 : i32
    %c0_i32_0 = arith.constant 0 : i32
    return %arg0, %c0_i32 : i32, i32
  }
}

</mosaic_0001>

<llo_original>
// kernel: tpu_custom_call.1
$region0: #{tpu_custom_call.1}
  #allocation0 [shape = 'u32[]', space=smem, size = 0x4, offset = 0x4, fixed_abs, tag = 'smem constant byte address 0x4 - core index']
  #allocation1 [shape = 'u32[144,128]{1,0:T(1,128)}', space=vmem, size = 0x12000, scoped, tag = 'internal scratch']
  #allocation2 [shape = 'f32[1,1]{1,0:T(1,128)S(6)}', space=smem, size = 0x200, scoped, tag = 'scoped memory for tpu_custom_call.1']
  %s0 = inlined_call_operand.vmem [shape: f32[8,512], index: 0, kind: input, shape index: {}]
  %s1 = inlined_call_operand.vmem [shape: f32[512,32], index: 1, kind: input, shape index: {}]
  %s2 = inlined_call_operand.vmem [shape: f32[1,32], index: 2, kind: input, shape index: {}]
  %s3 = inlined_call_operand.vmem [shape: f32[1,32], index: 3, kind: input, shape index: {}]
  %s4 = inlined_call_operand.<no memory space> [shape: f32[1,1], index: 4, kind: input, shape index: {}]
  %s5 = inlined_call_operand.vmem [shape: s32[8,1], index: 5, kind: input, shape index: {}]
  %s6 = inlined_call_operand.vmem [shape: f32[128,32], index: 6, kind: input, shape index: {}]
  %s7 = inlined_call_operand.vmem [shape: f32[8,1], index: 7, kind: output, shape index: {}]
  %s8 = sld [smem:[#allocation0]]
  $region38: #{tpu_custom_call.1} parent=0
    _
  %s10 = ssub.s32 1, %s8
  %s11 = scalar_select 0, %s10, %s8
  %12 = sst [smem:[#allocation2]] %s4
  // Predicated region
  $region2: #{tpu_custom_call.1} parent=0 // pred_check
    _
  $region3: #{tpu_custom_call.1} parent=0 // pred_check_branch
    %14 = sbr.rel (0) target = $region5
  $region4: #{tpu_custom_call.1} parent=0 // pred_region
    _
  $region5: #{tpu_custom_call.1} parent=0 // pred_fallthru
    _
  // Predicated region
  $region6: #{tpu_custom_call.1} parent=0 // pred_check
    _
  $region7: #{tpu_custom_call.1} parent=0 // pred_check_branch
    %16 = sbr.rel (0) target = $region9
  $region8: #{tpu_custom_call.1} parent=0 // pred_region
    _
  $region9: #{tpu_custom_call.1} parent=0 // pred_fallthru
    _
  // Predicated region
  $region10: #{tpu_custom_call.1} parent=0 // pred_check
    _
  $region11: #{tpu_custom_call.1} parent=0 // pred_check_branch
    %18 = sbr.rel (0) target = $region13
  $region12: #{tpu_custom_call.1} parent=0 // pred_region
    _
  $region13: #{tpu_custom_call.1} parent=0 // pred_fallthru
    _
  // Predicated region
  $region14: #{tpu_custom_call.1} parent=0 // pred_check
    _
  $region15: #{tpu_custom_call.1} parent=0 // pred_check_branch
    %20 = sbr.rel (0) target = $region17
  $region16: #{tpu_custom_call.1} parent=0 // pred_region
    _
  $region17: #{tpu_custom_call.1} parent=0 // pred_fallthru
    _
  // Predicated region
  $region18: #{tpu_custom_call.1} parent=0 // pred_check
    _
  $region19: #{tpu_custom_call.1} parent=0 // pred_check_branch
    %22 = sbr.rel (0) target = $region21
  $region20: #{tpu_custom_call.1} parent=0 // pred_region
    _
  $region21: #{tpu_custom_call.1} parent=0 // pred_fallthru
    _
  // Predicated region
  $region22: #{tpu_custom_call.1} parent=0 // pred_check
    _
  $region23: #{tpu_custom_call.1} parent=0 // pred_check_branch
    %24 = sbr.rel (0) target = $region25
  $region24: #{tpu_custom_call.1} parent=0 // pred_region
    _
  $region25: #{tpu_custom_call.1} parent=0 // pred_fallthru
    _
  // Predicated region
  $region26: #{tpu_custom_call.1} parent=0 // pred_check
    _
  $region27: #{tpu_custom_call.1} parent=0 // pred_check_branch
    %26 = sbr.rel (0) target = $region29
  $region28: #{tpu_custom_call.1} parent=0 // pred_region
    _
  $region29: #{tpu_custom_call.1} parent=0 // pred_fallthru
    _
  %v27 = vld [vmem:[%s0] sm:$0xff]
  %v28 = vld [vmem:[%s0 + $0x8] sm:$0xff]
  %v29 = vld [vmem:[%s0 + $0x10] sm:$0xff]
  %v30 = vld [vmem:[%s0 + $0x18] sm:$0xff]
  %v31 = vld [vmem:[%s1] sm:$0xff]
  %v32 = vld [vmem:[%s1 + $0x8] sm:$0xff]
  %v33 = vld [vmem:[%s1 + $0x10] sm:$0xff]
  %v34 = vld [vmem:[%s1 + $0x18] sm:$0xff]
  %v35 = vld [vmem:[%s1 + $0x20] sm:$0xff]
  %v36 = vld [vmem:[%s1 + $0x28] sm:$0xff]
  %v37 = vld [vmem:[%s1 + $0x30] sm:$0xff]
  %v38 = vld [vmem:[%s1 + $0x38] sm:$0xff]
  %v39 = vld [vmem:[%s1 + $0x40] sm:$0xff]
  %v40 = vld [vmem:[%s1 + $0x48] sm:$0xff]
  %v41 = vld [vmem:[%s1 + $0x50] sm:$0xff]
  %v42 = vld [vmem:[%s1 + $0x58] sm:$0xff]
  %v43 = vld [vmem:[%s1 + $0x60] sm:$0xff]
  %v44 = vld [vmem:[%s1 + $0x68] sm:$0xff]
  %v45 = vld [vmem:[%s1 + $0x70] sm:$0xff]
  %v46 = vld [vmem:[%s1 + $0x78] sm:$0xff]
  %v47 = vld [vmem:[%s1 + $0x80] sm:$0xff]
  %v48 = vld [vmem:[%s1 + $0x88] sm:$0xff]
  %v49 = vld [vmem:[%s1 + $0x90] sm:$0xff]
  %v50 = vld [vmem:[%s1 + $0x98] sm:$0xff]
  %v51 = vld [vmem:[%s1 + $0xa0] sm:$0xff]
  %v52 = vld [vmem:[%s1 + $0xa8] sm:$0xff]
  %v53 = vld [vmem:[%s1 + $0xb0] sm:$0xff]
  %v54 = vld [vmem:[%s1 + $0xb8] sm:$0xff]
  %v55 = vld [vmem:[%s1 + $0xc0] sm:$0xff]
  %v56 = vld [vmem:[%s1 + $0xc8] sm:$0xff]
  %v57 = vld [vmem:[%s1 + $0xd0] sm:$0xff]
  %v58 = vld [vmem:[%s1 + $0xd8] sm:$0xff]
  %v59 = vld [vmem:[%s1 + $0xe0] sm:$0xff]
  %v60 = vld [vmem:[%s1 + $0xe8] sm:$0xff]
  %v61 = vld [vmem:[%s1 + $0xf0] sm:$0xff]
  %v62 = vld [vmem:[%s1 + $0xf8] sm:$0xff]
  %v63 = vld [vmem:[%s1 + $0x100] sm:$0xff]
  %v64 = vld [vmem:[%s1 + $0x108] sm:$0xff]
  %v65 = vld [vmem:[%s1 + $0x110] sm:$0xff]
  %v66 = vld [vmem:[%s1 + $0x118] sm:$0xff]
  %v67 = vld [vmem:[%s1 + $0x120] sm:$0xff]
  %v68 = vld [vmem:[%s1 + $0x128] sm:$0xff]
  %v69 = vld [vmem:[%s1 + $0x130] sm:$0xff]
  %v70 = vld [vmem:[%s1 + $0x138] sm:$0xff]
  %v71 = vld [vmem:[%s1 + $0x140] sm:$0xff]
  %v72 = vld [vmem:[%s1 + $0x148] sm:$0xff]
  %v73 = vld [vmem:[%s1 + $0x150] sm:$0xff]
  %v74 = vld [vmem:[%s1 + $0x158] sm:$0xff]
  %v75 = vld [vmem:[%s1 + $0x160] sm:$0xff]
  %v76 = vld [vmem:[%s1 + $0x168] sm:$0xff]
  %v77 = vld [vmem:[%s1 + $0x170] sm:$0xff]
  %v78 = vld [vmem:[%s1 + $0x178] sm:$0xff]
  %v79 = vld [vmem:[%s1 + $0x180] sm:$0xff]
  %v80 = vld [vmem:[%s1 + $0x188] sm:$0xff]
  %v81 = vld [vmem:[%s1 + $0x190] sm:$0xff]
  %v82 = vld [vmem:[%s1 + $0x198] sm:$0xff]
  %v83 = vld [vmem:[%s1 + $0x1a0] sm:$0xff]
  %v84 = vld [vmem:[%s1 + $0x1a8] sm:$0xff]
  %v85 = vld [vmem:[%s1 + $0x1b0] sm:$0xff]
  %v86 = vld [vmem:[%s1 + $0x1b8] sm:$0xff]
  %v87 = vld [vmem:[%s1 + $0x1c0] sm:$0xff]
  %v88 = vld [vmem:[%s1 + $0x1c8] sm:$0xff]
  %v89 = vld [vmem:[%s1 + $0x1d0] sm:$0xff]
  %v90 = vld [vmem:[%s1 + $0x1d8] sm:$0xff]
  %v91 = vld [vmem:[%s1 + $0x1e0] sm:$0xff]
  %v92 = vld [vmem:[%s1 + $0x1e8] sm:$0xff]
  %v93 = vld [vmem:[%s1 + $0x1f0] sm:$0xff]
  %v94 = vld [vmem:[%s1 + $0x1f8] sm:$0xff]
  %95 = vmatprep.subr.mxu0 0.0
  %96 = vmatpush1.msra.mxu0 %v31
  %97 = vmatprep.subr.mxu0 0.0
  %98 = vmatpush1.msra.mxu0 %v32
  %99 = vmatprep.subr.mxu0 0.0
  %100 = vmatpush1.msra.mxu0 %v33
  %101 = vmatprep.subr.mxu0 0.0
  %102 = vmatpush1.msra.mxu0 %v34
  %103 = vmatprep.subr.mxu0 0.0
  %104 = vmatpush1.msra.mxu0 %v35
  %105 = vmatprep.subr.mxu0 0.0
  %106 = vmatpush1.msra.mxu0 %v36
  %107 = vmatprep.subr.mxu0 0.0
  %108 = vmatpush1.msra.mxu0 %v37
  %109 = vmatprep.subr.mxu0 0.0
  %110 = vmatpush1.msra.mxu0 %v38
  %111 = vmatprep.subr.mxu0 0.0
  %112 = vmatpush1.msra.mxu0 %v39
  %113 = vmatprep.subr.mxu0 0.0
  %114 = vmatpush1.msra.mxu0 %v40
  %115 = vmatprep.subr.mxu0 0.0
  %116 = vmatpush1.msra.mxu0 %v41
  %117 = vmatprep.subr.mxu0 0.0
  %118 = vmatpush1.msra.mxu0 %v42
  %119 = vmatprep.subr.mxu0 0.0
  %120 = vmatpush1.msra.mxu0 %v43
  %121 = vmatprep.subr.mxu0 0.0
  %122 = vmatpush1.msra.mxu0 %v44
  %123 = vmatprep.subr.mxu0 0.0
  %124 = vmatpush1.msra.mxu0 %v45
  %125 = vmatprep.subr.mxu0 0.0
  %126 = vmatpush1.msra.mxu0 %v46
  %127 = vmatprep.subr.mxu0 0.0
  %128 = vmatpush1.msra.mxu0 %v47
  %129 = vmatprep.subr.mxu0 0.0
  %130 = vmatpush1.msra.mxu0 %v48
  %131 = vmatprep.subr.mxu0 0.0
  %132 = vmatpush1.msra.mxu0 %v49
  %133 = vmatprep.subr.mxu0 0.0
  %134 = vmatpush1.msra.mxu0 %v50
  %135 = vmatprep.subr.mxu0 0.0
  %136 = vmatpush1.msra.mxu0 %v51
  %137 = vmatprep.subr.mxu0 0.0
  %138 = vmatpush1.msra.mxu0 %v52
  %139 = vmatprep.subr.mxu0 0.0
  %140 = vmatpush1.msra.mxu0 %v53
  %141 = vmatprep.subr.mxu0 0.0
  %142 = vmatpush1.msra.mxu0 %v54
  %143 = vmatprep.subr.mxu0 0.0
  %144 = vmatpush1.msra.mxu0 %v55
  %145 = vmatprep.subr.mxu0 0.0
  %146 = vmatpush1.msra.mxu0 %v56
  %147 = vmatprep.subr.mxu0 0.0
  %148 = vmatpush1.msra.mxu0 %v57
  %149 = vmatprep.subr.mxu0 0.0
  %150 = vmatpush1.msra.mxu0 %v58
  %151 = vmatprep.subr.mxu0 0.0
  %152 = vmatpush1.msra.mxu0 %v59
  %153 = vmatprep.subr.mxu0 0.0
  %154 = vmatpush1.msra.mxu0 %v60
  %155 = vmatprep.subr.mxu0 0.0
  %156 = vmatpush1.msra.mxu0 %v61
  %157 = vmatprep.subr.mxu0 0.0
  %158 = vmatpush1.msra.mxu0 %v62
  %159 = vmatprep.mubr.f32.mxu0 %v28
  %160 = vmatmul.mubr.f32.gmra.mrb[0].mxu0 %v27
  %v161 = vpop.f32.mrb[0].mxu0
  %v162 = vadd.f32 0.0, %v161
  %v163 = vpop.f32.mrb[0].mxu0
  %164 = vdwg.mxu0
  %165 = vmatprep.subr.mxu0 0.0
  %166 = vmatpush1.msra.mxu0 %v63
  %167 = vmatprep.subr.mxu0 0.0
  %168 = vmatpush1.msra.mxu0 %v64
  %169 = vmatprep.subr.mxu0 0.0
  %170 = vmatpush1.msra.mxu0 %v65
  %171 = vmatprep.subr.mxu0 0.0
  %172 = vmatpush1.msra.mxu0 %v66
  %173 = vmatprep.subr.mxu0 0.0
  %174 = vmatpush1.msra.mxu0 %v67
  %175 = vmatprep.subr.mxu0 0.0
  %176 = vmatpush1.msra.mxu0 %v68
  %177 = vmatprep.subr.mxu0 0.0
  %178 = vmatpush1.msra.mxu0 %v69
  %179 = vmatprep.subr.mxu0 0.0
  %180 = vmatpush1.msra.mxu0 %v70
  %181 = vmatprep.subr.mxu0 0.0
  %182 = vmatpush1.msra.mxu0 %v71
  %183 = vmatprep.subr.mxu0 0.0
  %184 = vmatpush1.msra.mxu0 %v72
  %185 = vmatprep.subr.mxu0 0.0
  %186 = vmatpush1.msra.mxu0 %v73
  %187 = vmatprep.subr.mxu0 0.0
  %188 = vmatpush1.msra.mxu0 %v74
  %189 = vmatprep.subr.mxu0 0.0
  %190 = vmatpush1.msra.mxu0 %v75
  %191 = vmatprep.subr.mxu0 0.0
  %192 = vmatpush1.msra.mxu0 %v76
  %193 = vmatprep.subr.mxu0 0.0
  %194 = vmatpush1.msra.mxu0 %v77
  %195 = vmatprep.subr.mxu0 0.0
  %196 = vmatpush1.msra.mxu0 %v78
  %197 = vmatprep.subr.mxu0 0.0
  %198 = vmatpush1.msra.mxu0 %v79
  %199 = vmatprep.subr.mxu0 0.0
  %200 = vmatpush1.msra.mxu0 %v80
  %201 = vmatprep.subr.mxu0 0.0
  %202 = vmatpush1.msra.mxu0 %v81
  %203 = vmatprep.subr.mxu0 0.0
  %204 = vmatpush1.msra.mxu0 %v82
  %205 = vmatprep.subr.mxu0 0.0
  %206 = vmatpush1.msra.mxu0 %v83
  %207 = vmatprep.subr.mxu0 0.0
  %208 = vmatpush1.msra.mxu0 %v84
  %209 = vmatprep.subr.mxu0 0.0
  %210 = vmatpush1.msra.mxu0 %v85
  %211 = vmatprep.subr.mxu0 0.0
  %212 = vmatpush1.msra.mxu0 %v86
  %213 = vmatprep.subr.mxu0 0.0
  %214 = vmatpush1.msra.mxu0 %v87
  %215 = vmatprep.subr.mxu0 0.0
  %216 = vmatpush1.msra.mxu0 %v88
  %217 = vmatprep.subr.mxu0 0.0
  %218 = vmatpush1.msra.mxu0 %v89
  %219 = vmatprep.subr.mxu0 0.0
  %220 = vmatpush1.msra.mxu0 %v90
  %221 = vmatprep.subr.mxu0 0.0
  %222 = vmatpush1.msra.mxu0 %v91
  %223 = vmatprep.subr.mxu0 0.0
  %224 = vmatpush1.msra.mxu0 %v92
  %225 = vmatprep.subr.mxu0 0.0
  %226 = vmatpush1.msra.mxu0 %v93
  %227 = vmatprep.subr.mxu0 0.0
  %228 = vmatpush1.msra.mxu0 %v94
  %229 = vmatprep.mubr.f32.mxu0 %v30
  %230 = vmatmul.mubr.f32.gmra.mrb[0].mxu0 %v29
  %v231 = vpop.f32.mrb[0].mxu0
  %v232 = vadd.f32 %v162, %v231
  %v233 = vpop.f32.mrb[0].mxu0
  %234 = vdwg.mxu0
  %v235 = vmul.f32 %v232, 0.044194173
  %v236 = vld [vmem:[%s2] sm:$0x1]
  %v238 = vlaneseq
  %v239 = vshrl.u32 %v238, 7
  %v240 = vsub.s32 0, %v239
  %v241 = vrot.slane %v236, %v240
  %v243 = vadd.f32 %v235, %v241
  %vm244 = vcmp.ge.f32.partialorder %v243, 0.0
  %v245 = vmul.f32 %v243, 0.2
  %v246 = vsel %vm244, %v243, %v245
  %v247 = vmul.f32 %v246, 1.4142135
  %v248 = vld [vmem:[%s5] sm:$0xff]
  %v249 = vlaneseq
  %v250 = vand.u32 %v249, 127
  %251 = vset.pattern.permute.xlu0 0
  %252 = vperm.xlu0 %251, %v248
  %v253 = vpop.permute.xlu0 %252
  %vm254 = vcmp.eq.s32.totalorder %v253, %v250
  %v255 = vsel %vm254, 1, 0
  %v256 = vcvt.s32.f32 %v255
  %v257 = vld [vmem:[%s6] sm:$0xff]
  %v258 = vld [vmem:[%s6 + $0x8] sm:$0xff]
  %v259 = vld [vmem:[%s6 + $0x10] sm:$0xff]
  %v260 = vld [vmem:[%s6 + $0x18] sm:$0xff]
  %v261 = vld [vmem:[%s6 + $0x20] sm:$0xff]
  %v262 = vld [vmem:[%s6 + $0x28] sm:$0xff]
  %v263 = vld [vmem:[%s6 + $0x30] sm:$0xff]
  %v264 = vld [vmem:[%s6 + $0x38] sm:$0xff]
  %v265 = vld [vmem:[%s6 + $0x40] sm:$0xff]
  %v266 = vld [vmem:[%s6 + $0x48] sm:$0xff]
  %v267 = vld [vmem:[%s6 + $0x50] sm:$0xff]
  %v268 = vld [vmem:[%s6 + $0x58] sm:$0xff]
  %v269 = vld [vmem:[%s6 + $0x60] sm:$0xff]
  %v270 = vld [vmem:[%s6 + $0x68] sm:$0xff]
  %v271 = vld [vmem:[%s6 + $0x70] sm:$0xff]
  %v272 = vld [vmem:[%s6 + $0x78] sm:$0xff]
  %273 = vmatprep.subr.mxu0 0.0
  %274 = vmatpush1.msra.mxu0 %v257
  %275 = vmatprep.subr.mxu0 0.0
  %276 = vmatpush1.msra.mxu0 %v258
  %277 = vmatprep.subr.mxu0 0.0
  %278 = vmatpush1.msra.mxu0 %v259
  %279 = vmatprep.subr.mxu0 0.0
  %280 = vmatpush1.msra.mxu0 %v260
  %281 = vmatprep.subr.mxu0 0.0
  %282 = vmatpush1.msra.mxu0 %v261
  %283 = vmatprep.subr.mxu0 0.0
  %284 = vmatpush1.msra.mxu0 %v262
  %285 = vmatprep.subr.mxu0 0.0
  %286 = vmatpush1.msra.mxu0 %v263
  %287 = vmatprep.subr.mxu0 0.0
  %288 = vmatpush1.msra.mxu0 %v264
  %289 = vmatprep.subr.mxu0 0.0
  %290 = vmatpush1.msra.mxu0 %v265
  %291 = vmatprep.subr.mxu0 0.0
  %292 = vmatpush1.msra.mxu0 %v266
  %293 = vmatprep.subr.mxu0 0.0
  %294 = vmatpush1.msra.mxu0 %v267
  %295 = vmatprep.subr.mxu0 0.0
  %296 = vmatpush1.msra.mxu0 %v268
  %297 = vmatprep.subr.mxu0 0.0
  %298 = vmatpush1.msra.mxu0 %v269
  %299 = vmatprep.subr.mxu0 0.0
  %300 = vmatpush1.msra.mxu0 %v270
  %301 = vmatprep.subr.mxu0 0.0
  %302 = vmatpush1.msra.mxu0 %v271
  %303 = vmatprep.subr.mxu0 0.0
  %304 = vmatpush1.msra.mxu0 %v272
  %305 = vmatprep.subr.mxu0 0.0
  %306 = vmatpush1.msra.mxu0 0.0
  %307 = vmatprep.subr.mxu0 0.0
  %308 = vmatpush1.msra.mxu0 0.0
  %309 = vmatprep.subr.mxu0 0.0
  %310 = vmatpush1.msra.mxu0 0.0
  %311 = vmatprep.subr.mxu0 0.0
  %312 = vmatpush1.msra.mxu0 0.0
  %313 = vmatprep.subr.mxu0 0.0
  %314 = vmatpush1.msra.mxu0 0.0
  %315 = vmatprep.subr.mxu0 0.0
  %316 = vmatpush1.msra.mxu0 0.0
  %317 = vmatprep.subr.mxu0 0.0
  %318 = vmatpush1.msra.mxu0 0.0
  %319 = vmatprep.subr.mxu0 0.0
  %320 = vmatpush1.msra.mxu0 0.0
  %321 = vmatprep.subr.mxu0 0.0
  %322 = vmatpush1.msra.mxu0 0.0
  %323 = vmatprep.subr.mxu0 0.0
  %324 = vmatpush1.msra.mxu0 0.0
  %325 = vmatprep.subr.mxu0 0.0
  %326 = vmatpush1.msra.mxu0 0.0
  %327 = vmatprep.subr.mxu0 0.0
  %328 = vmatpush1.msra.mxu0 0.0
  %329 = vmatprep.subr.mxu0 0.0
  %330 = vmatpush1.msra.mxu0 0.0
  %331 = vmatprep.subr.mxu0 0.0
  %332 = vmatpush1.msra.mxu0 0.0
  %333 = vmatprep.subr.mxu0 0.0
  %334 = vmatpush1.msra.mxu0 0.0
  %335 = vmatprep.subr.mxu0 0.0
  %336 = vmatpush1.msra.mxu0 0.0
  %337 = vmatprep.mubr.f32.mxu0 0.0
  %338 = vmatmul.mubr.f32.gmra.mrb[0].mxu0 %v256
  %v339 = vpop.f32.mrb[0].mxu0
  %v340 = vadd.f32 0.0, %v339
  %v341 = vpop.f32.mrb[0].mxu0
  %342 = vdwg.mxu0
  %v343 = vld [vmem:[%s3] sm:$0x1]
  %v344 = vmul.f32 %v343, 0.17677669
  %v346 = vlaneseq
  %v347 = vshrl.u32 %v346, 7
  %v348 = vsub.s32 0, %v347
  %v349 = vrot.slane %v344, %v348
  %v351 = vadd.f32 %v349, %v340
  %v352 = vmul.f32 %v247, %v351
  %vm353 = vcmask 261120
  %v354 = vsel %vm353, %v352, 0.0
  %355 = vadd.xlane.f32.xlu0 %v354
  %v356 = vpop.xlane.xlu0 %355
  %s357 = sld [smem:[#allocation2]]
  %v358 = vstv %s357
  %v359 = vadd.f32 %v356, %v358
  %vm360 = vcmask 7168
  %361 = vst.msk [vmem:[%s7] sm:$0xff] %vm360, %v359
  // Predicated region
  $region30: #{tpu_custom_call.1} parent=0 // pred_check
    _
  $region31: #{tpu_custom_call.1} parent=0 // pred_check_branch
    %363 = sbr.rel (0) target = $region33
  $region32: #{tpu_custom_call.1} parent=0 // pred_region
    _
  $region33: #{tpu_custom_call.1} parent=0 // pred_fallthru
    _
  // Predicated region
  $region34: #{tpu_custom_call.1} parent=0 // pred_check
    _
  $region35: #{tpu_custom_call.1} parent=0 // pred_check_branch
    %365 = sbr.rel (0) target = $region37
  $region36: #{tpu_custom_call.1} parent=0 // pred_region
    _
  $region37: #{tpu_custom_call.1} parent=0 // pred_fallthru
    _

// kernel: tpu_custom_call.1
$region0: #{tpu_custom_call.1}
  #allocation0 [shape = 'u32[]', space=smem, size = 0x4, offset = 0x4, fixed_abs, tag = 'smem constant byte address 0x4 - core index']
  #allocation1 [shape = 'u32[144,128]{1,0:T(1,128)}', space=vmem, size = 0x12000, scoped, tag = 'internal scratch']
  #allocation2 [shape = 'f32[1,1]{1,0:T(1,128)S(6)}', space=smem, size = 0x200, scoped, tag = 'scoped memory for tpu_custom_call.1']
  %s0 = inlined_call_operand.vmem [shape: f32[8,512], index: 0, kind: input, shape index: {}]
  %s1 = inlined_call_operand.vmem [shape: f32[512,32], index: 1, kind: input, shape index: {}]
  %s2 = inlined_call_operand.vmem [shape: f32[1,32], index: 2, kind: input, shape index: {}]
  %s3 = inlined_call_operand.vmem [shape: f32[1,32], index: 3, kind: input, shape index: {}]
  %s4 = inlined_call_operand.<no memory space> [shape: f32[1,1], index: 4, kind: input, shape index: {}]
  %s5 = inlined_call_operand.vmem [shape: s32[8,1], index: 5, kind: input, shape index: {}]
  %s6 = inlined_call_operand.vmem [shape: f32[128,32], index: 6, kind: input, shape index: {}]
  %s7 = inlined_call_operand.vmem [shape: f32[8,1], index: 7, kind: output, shape index: {}]
  %s8 = sld [smem:[#allocation0]]
  $region38: #{tpu_custom_call.1} parent=0
    _
  %s10 = ssub.s32 1, %s8
  %s11 = scalar_select 0, %s10, %s8
  %12 = sst [smem:[#allocation2]] %s4
  // Predicated region
  $region2: #{tpu_custom_call.1} parent=0 // pred_check
    _
  $region3: #{tpu_custom_call.1} parent=0 // pred_check_branch
    %14 = sbr.rel (0) target = $region5
  $region4: #{tpu_custom_call.1} parent=0 // pred_region
    _
  $region5: #{tpu_custom_call.1} parent=0 // pred_fallthru
    _
  // Predicated region
  $region6: #{tpu_custom_call.1} parent=0 // pred_check
    _
  $region7: #{tpu_custom_call.1} parent=0 // pred_check_branch
    %16 = sbr.rel (0) target = $region9
  $region8: #{tpu_custom_call.1} parent=0 // pred_region
    _
  $region9: #{tpu_custom_call.1} parent=0 // pred_fallthru
    _
  // Predicated region
  $region10: #{tpu_custom_call.1} parent=0 // pred_check
    _
  $region11: #{tpu_custom_call.1} parent=0 // pred_check_branch
    %18 = sbr.rel (0) target = $region13
  $region12: #{tpu_custom_call.1} parent=0 // pred_region
    _
  $region13: #{tpu_custom_call.1} parent=0 // pred_fallthru
    _
  // Predicated region
  $region14: #{tpu_custom_call.1} parent=0 // pred_check
    _
  $region15: #{tpu_custom_call.1} parent=0 // pred_check_branch
    %20 = sbr.rel (0) target = $region17
  $region16: #{tpu_custom_call.1} parent=0 // pred_region
    _
  $region17: #{tpu_custom_call.1} parent=0 // pred_fallthru
    _
  // Predicated region
  $region18: #{tpu_custom_call.1} parent=0 // pred_check
    _
  $region19: #{tpu_custom_call.1} parent=0 // pred_check_branch
    %22 = sbr.rel (0) target = $region21
  $region20: #{tpu_custom_call.1} parent=0 // pred_region
    _
  $region21: #{tpu_custom_call.1} parent=0 // pred_fallthru
    _
  // Predicated region
  $region22: #{tpu_custom_call.1} parent=0 // pred_check
    _
  $region23: #{tpu_custom_call.1} parent=0 // pred_check_branch
    %24 = sbr.rel (0) target = $region25
  $region24: #{tpu_custom_call.1} parent=0 // pred_region
    _
  $region25: #{tpu_custom_call.1} parent=0 // pred_fallthru
    _
  // Predicated region
  $region26: #{tpu_custom_call.1} parent=0 // pred_check
    _
  $region27: #{tpu_custom_call.1} parent=0 // pred_check_branch
    %26 = sbr.rel (0) target = $region29
  $region28: #{tpu_custom_call.1} parent=0 // pred_region
    _
  $region29: #{tpu_custom_call.1} parent=0 // pred_fallthru
    _
  %v27 = vld [vmem:[%s0] sm:$0xff]
  %v28 = vld [vmem:[%s0 + $0x8] sm:$0xff]
  %v29 = vld [vmem:[%s0 + $0x10] sm:$0xff]
  %v30 = vld [vmem:[%s0 + $0x18] sm:$0xff]
  %v31 = vld [vmem:[%s1] sm:$0xff]
  %v32 = vld [vmem:[%s1 + $0x8] sm:$0xff]
  %v33 = vld [vmem:[%s1 + $0x10] sm:$0xff]
  %v34 = vld [vmem:[%s1 + $0x18] sm:$0xff]
  %v35 = vld [vmem:[%s1 + $0x20] sm:$0xff]
  %v36 = vld [vmem:[%s1 + $0x28] sm:$0xff]
  %v37 = vld [vmem:[%s1 + $0x30] sm:$0xff]
  %v38 = vld [vmem:[%s1 + $0x38] sm:$0xff]
  %v39 = vld [vmem:[%s1 + $0x40] sm:$0xff]
  %v40 = vld [vmem:[%s1 + $0x48] sm:$0xff]
  %v41 = vld [vmem:[%s1 + $0x50] sm:$0xff]
  %v42 = vld [vmem:[%s1 + $0x58] sm:$0xff]
  %v43 = vld [vmem:[%s1 + $0x60] sm:$0xff]
  %v44 = vld [vmem:[%s1 + $0x68] sm:$0xff]
  %v45 = vld [vmem:[%s1 + $0x70] sm:$0xff]
  %v46 = vld [vmem:[%s1 + $0x78] sm:$0xff]
  %v47 = vld [vmem:[%s1 + $0x80] sm:$0xff]
  %v48 = vld [vmem:[%s1 + $0x88] sm:$0xff]
  %v49 = vld [vmem:[%s1 + $0x90] sm:$0xff]
  %v50 = vld [vmem:[%s1 + $0x98] sm:$0xff]
  %v51 = vld [vmem:[%s1 + $0xa0] sm:$0xff]
  %v52 = vld [vmem:[%s1 + $0xa8] sm:$0xff]
  %v53 = vld [vmem:[%s1 + $0xb0] sm:$0xff]
  %v54 = vld [vmem:[%s1 + $0xb8] sm:$0xff]
  %v55 = vld [vmem:[%s1 + $0xc0] sm:$0xff]
  %v56 = vld [vmem:[%s1 + $0xc8] sm:$0xff]
  %v57 = vld [vmem:[%s1 + $0xd0] sm:$0xff]
  %v58 = vld [vmem:[%s1 + $0xd8] sm:$0xff]
  %v59 = vld [vmem:[%s1 + $0xe0] sm:$0xff]
  %v60 = vld [vmem:[%s1 + $0xe8] sm:$0xff]
  %v61 = vld [vmem:[%s1 + $0xf0] sm:$0xff]
  %v62 = vld [vmem:[%s1 + $0xf8] sm:$0xff]
  %v63 = vld [vmem:[%s1 + $0x100] sm:$0xff]
  %v64 = vld [vmem:[%s1 + $0x108] sm:$0xff]
  %v65 = vld [vmem:[%s1 + $0x110] sm:$0xff]
  %v66 = vld [vmem:[%s1 + $0x118] sm:$0xff]
  %v67 = vld [vmem:[%s1 + $0x120] sm:$0xff]
  %v68 = vld [vmem:[%s1 + $0x128] sm:$0xff]
  %v69 = vld [vmem:[%s1 + $0x130] sm:$0xff]
  %v70 = vld [vmem:[%s1 + $0x138] sm:$0xff]
  %v71 = vld [vmem:[%s1 + $0x140] sm:$0xff]
  %v72 = vld [vmem:[%s1 + $0x148] sm:$0xff]
  %v73 = vld [vmem:[%s1 + $0x150] sm:$0xff]
  %v74 = vld [vmem:[%s1 + $0x158] sm:$0xff]
  %v75 = vld [vmem:[%s1 + $0x160] sm:$0xff]
  %v76 = vld [vmem:[%s1 + $0x168] sm:$0xff]
  %v77 = vld [vmem:[%s1 + $0x170] sm:$0xff]
  %v78 = vld [vmem:[%s1 + $0x178] sm:$0xff]
  %v79 = vld [vmem:[%s1 + $0x180] sm:$0xff]
  %v80 = vld [vmem:[%s1 + $0x188] sm:$0xff]
  %v81 = vld [vmem:[%s1 + $0x190] sm:$0xff]
  %v82 = vld [vmem:[%s1 + $0x198] sm:$0xff]
  %v83 = vld [vmem:[%s1 + $0x1a0] sm:$0xff]
  %v84 = vld [vmem:[%s1 + $0x1a8] sm:$0xff]
  %v85 = vld [vmem:[%s1 + $0x1b0] sm:$0xff]
  %v86 = vld [vmem:[%s1 + $0x1b8] sm:$0xff]
  %v87 = vld [vmem:[%s1 + $0x1c0] sm:$0xff]
  %v88 = vld [vmem:[%s1 + $0x1c8] sm:$0xff]
  %v89 = vld [vmem:[%s1 + $0x1d0] sm:$0xff]
  %v90 = vld [vmem:[%s1 + $0x1d8] sm:$0xff]
  %v91 = vld [vmem:[%s1 + $0x1e0] sm:$0xff]
  %v92 = vld [vmem:[%s1 + $0x1e8] sm:$0xff]
  %v93 = vld [vmem:[%s1 + $0x1f0] sm:$0xff]
  %v94 = vld [vmem:[%s1 + $0x1f8] sm:$0xff]
  %95 = vmatprep.subr.mxu0 0.0
  %96 = vmatpush1.msra.mxu0 %v31
  %97 = vmatprep.subr.mxu0 0.0
  %98 = vmatpush1.msra.mxu0 %v32
  %99 = vmatprep.subr.mxu0 0.0
  %100 = vmatpush1.msra.mxu0 %v33
  %101 = vmatprep.subr.mxu0 0.0
  %102 = vmatpush1.msra.mxu0 %v34
  %103 = vmatprep.subr.mxu0 0.0
  %104 = vmatpush1.msra.mxu0 %v35
  %105 = vmatprep.subr.mxu0 0.0
  %106 = vmatpush1.msra.mxu0 %v36
  %107 = vmatprep.subr.mxu0 0.0
  %108 = vmatpush1.msra.mxu0 %v37
  %109 = vmatprep.subr.mxu0 0.0
  %110 = vmatpush1.msra.mxu0 %v38
  %111 = vmatprep.subr.mxu0 0.0
  %112 = vmatpush1.msra.mxu0 %v39
  %113 = vmatprep.subr.mxu0 0.0
  %114 = vmatpush1.msra.mxu0 %v40
  %115 = vmatprep.subr.mxu0 0.0
  %116 = vmatpush1.msra.mxu0 %v41
  %117 = vmatprep.subr.mxu0 0.0
  %118 = vmatpush1.msra.mxu0 %v42
  %119 = vmatprep.subr.mxu0 0.0
  %120 = vmatpush1.msra.mxu0 %v43
  %121 = vmatprep.subr.mxu0 0.0
  %122 = vmatpush1.msra.mxu0 %v44
  %123 = vmatprep.subr.mxu0 0.0
  %124 = vmatpush1.msra.mxu0 %v45
  %125 = vmatprep.subr.mxu0 0.0
  %126 = vmatpush1.msra.mxu0 %v46
  %127 = vmatprep.subr.mxu0 0.0
  %128 = vmatpush1.msra.mxu0 %v47
  %129 = vmatprep.subr.mxu0 0.0
  %130 = vmatpush1.msra.mxu0 %v48
  %131 = vmatprep.subr.mxu0 0.0
  %132 = vmatpush1.msra.mxu0 %v49
  %133 = vmatprep.subr.mxu0 0.0
  %134 = vmatpush1.msra.mxu0 %v50
  %135 = vmatprep.subr.mxu0 0.0
  %136 = vmatpush1.msra.mxu0 %v51
  %137 = vmatprep.subr.mxu0 0.0
  %138 = vmatpush1.msra.mxu0 %v52
  %139 = vmatprep.subr.mxu0 0.0
  %140 = vmatpush1.msra.mxu0 %v53
  %141 = vmatprep.subr.mxu0 0.0
  %142 = vmatpush1.msra.mxu0 %v54
  %143 = vmatprep.subr.mxu0 0.0
  %144 = vmatpush1.msra.mxu0 %v55
  %145 = vmatprep.subr.mxu0 0.0
  %146 = vmatpush1.msra.mxu0 %v56
  %147 = vmatprep.subr.mxu0 0.0
  %148 = vmatpush1.msra.mxu0 %v57
  %149 = vmatprep.subr.mxu0 0.0
  %150 = vmatpush1.msra.mxu0 %v58
  %151 = vmatprep.subr.mxu0 0.0
  %152 = vmatpush1.msra.mxu0 %v59
  %153 = vmatprep.subr.mxu0 0.0
  %154 = vmatpush1.msra.mxu0 %v60
  %155 = vmatprep.subr.mxu0 0.0
  %156 = vmatpush1.msra.mxu0 %v61
  %157 = vmatprep.subr.mxu0 0.0
  %158 = vmatpush1.msra.mxu0 %v62
  %159 = vmatprep.mubr.f32.mxu0 %v28
  %160 = vmatmul.mubr.f32.gmra.mrb[0].mxu0 %v27
  %v161 = vpop.f32.mrb[0].mxu0
  %v162 = vadd.f32 0.0, %v161
  %v163 = vpop.f32.mrb[0].mxu0
  %164 = vdwg.mxu0
  %165 = vmatprep.subr.mxu0 0.0
  %166 = vmatpush1.msra.mxu0 %v63
  %167 = vmatprep.subr.mxu0 0.0
  %168 = vmatpush1.msra.mxu0 %v64
  %169 = vmatprep.subr.mxu0 0.0
  %170 = vmatpush1.msra.mxu0 %v65
  %171 = vmatprep.subr.mxu0 0.0
  %172 = vmatpush1.msra.mxu0 %v66
  %173 = vmatprep.subr.mxu0 0.0
  %174 = vmatpush1.msra.mxu0 %v67
  %175 = vmatprep.subr.mxu0 0.0
  %176 = vmatpush1.msra.mxu0 %v68
  %177 = vmatprep.subr.mxu0 0.0
  %178 = vmatpush1.msra.mxu0 %v69
  %179 = vmatprep.subr.mxu0 0.0
  %180 = vmatpush1.msra.mxu0 %v70
  %181 = vmatprep.subr.mxu0 0.0
  %182 = vmatpush1.msra.mxu0 %v71
  %183 = vmatprep.subr.mxu0 0.0
  %184 = vmatpush1.msra.mxu0 %v72
  %185 = vmatprep.subr.mxu0 0.0
  %186 = vmatpush1.msra.mxu0 %v73
  %187 = vmatprep.subr.mxu0 0.0
  %188 = vmatpush1.msra.mxu0 %v74
  %189 = vmatprep.subr.mxu0 0.0
  %190 = vmatpush1.msra.mxu0 %v75
  %191 = vmatprep.subr.mxu0 0.0
  %192 = vmatpush1.msra.mxu0 %v76
  %193 = vmatprep.subr.mxu0 0.0
  %194 = vmatpush1.msra.mxu0 %v77
  %195 = vmatprep.subr.mxu0 0.0
  %196 = vmatpush1.msra.mxu0 %v78
  %197 = vmatprep.subr.mxu0 0.0
  %198 = vmatpush1.msra.mxu0 %v79
  %199 = vmatprep.subr.mxu0 0.0
  %200 = vmatpush1.msra.mxu0 %v80
  %201 = vmatprep.subr.mxu0 0.0
  %202 = vmatpush1.msra.mxu0 %v81
  %203 = vmatprep.subr.mxu0 0.0
  %204 = vmatpush1.msra.mxu0 %v82
  %205 = vmatprep.subr.mxu0 0.0
  %206 = vmatpush1.msra.mxu0 %v83
  %207 = vmatprep.subr.mxu0 0.0
  %208 = vmatpush1.msra.mxu0 %v84
  %209 = vmatprep.subr.mxu0 0.0
  %210 = vmatpush1.msra.mxu0 %v85
  %211 = vmatprep.subr.mxu0 0.0
  %212 = vmatpush1.msra.mxu0 %v86
  %213 = vmatprep.subr.mxu0 0.0
  %214 = vmatpush1.msra.mxu0 %v87
  %215 = vmatprep.subr.mxu0 0.0
  %216 = vmatpush1.msra.mxu0 %v88
  %217 = vmatprep.subr.mxu0 0.0
  %218 = vmatpush1.msra.mxu0 %v89
  %219 = vmatprep.subr.mxu0 0.0
  %220 = vmatpush1.msra.mxu0 %v90
  %221 = vmatprep.subr.mxu0 0.0
  %222 = vmatpush1.msra.mxu0 %v91
  %223 = vmatprep.subr.mxu0 0.0
  %224 = vmatpush1.msra.mxu0 %v92
  %225 = vmatprep.subr.mxu0 0.0
  %226 = vmatpush1.msra.mxu0 %v93
  %227 = vmatprep.subr.mxu0 0.0
  %228 = vmatpush1.msra.mxu0 %v94
  %229 = vmatprep.mubr.f32.mxu0 %v30
  %230 = vmatmul.mubr.f32.gmra.mrb[0].mxu0 %v29
  %v231 = vpop.f32.mrb[0].mxu0
  %v232 = vadd.f32 %v162, %v231
  %v233 = vpop.f32.mrb[0].mxu0
  %234 = vdwg.mxu0
  %v235 = vmul.f32 %v232, 0.044194173
  %v236 = vld [vmem:[%s2] sm:$0x1]
  %v238 = vlaneseq
  %v239 = vshrl.u32 %v238, 7
  %v240 = vsub.s32 0, %v239
  %v241 = vrot.slane %v236, %v240
  %v243 = vadd.f32 %v235, %v241
  %vm244 = vcmp.ge.f32.partialorder %v243, 0.0
  %v245 = vmul.f32 %v243, 0.2
  %v246 = vsel %vm244, %v243, %v245
  %v247 = vmul.f32 %v246, 1.4142135
  %v248 = vld [vmem:[%s5] sm:$0xff]
  %v249 = vlaneseq
  %v250 = vand.u32 %v249, 127
  %251 = vset.pattern.permute.xlu0 0
  %252 = vperm.xlu0 %251, %v248
  %v253 = vpop.permute.xlu0 %252
  %vm254 = vcmp.eq.s32.totalorder %v253, %v250
  %v255 = vsel %vm254, 1, 0
  %v256 = vcvt.s32.f32 %v255
  %v257 = vld [vmem:[%s6] sm:$0xff]
  %v258 = vld [vmem:[%s6 + $0x8] sm:$0xff]
  %v259 = vld [vmem:[%s6 + $0x10] sm:$0xff]
  %v260 = vld [vmem:[%s6 + $0x18] sm:$0xff]
  %v261 = vld [vmem:[%s6 + $0x20] sm:$0xff]
  %v262 = vld [vmem:[%s6 + $0x28] sm:$0xff]
  %v263 = vld [vmem:[%s6 + $0x30] sm:$0xff]
  %v264 = vld [vmem:[%s6 + $0x38] sm:$0xff]
  %v265 = vld [vmem:[%s6 + $0x40] sm:$0xff]
  %v266 = vld [vmem:[%s6 + $0x48] sm:$0xff]
  %v267 = vld [vmem:[%s6 + $0x50] sm:$0xff]
  %v268 = vld [vmem:[%s6 + $0x58] sm:$0xff]
  %v269 = vld [vmem:[%s6 + $0x60] sm:$0xff]
  %v270 = vld [vmem:[%s6 + $0x68] sm:$0xff]
  %v271 = vld [vmem:[%s6 + $0x70] sm:$0xff]
  %v272 = vld [vmem:[%s6 + $0x78] sm:$0xff]
  %273 = vmatprep.subr.mxu0 0.0
  %274 = vmatpush1.msra.mxu0 %v257
  %275 = vmatprep.subr.mxu0 0.0
  %276 = vmatpush1.msra.mxu0 %v258
  %277 = vmatprep.subr.mxu0 0.0
  %278 = vmatpush1.msra.mxu0 %v259
  %279 = vmatprep.subr.mxu0 0.0
  %280 = vmatpush1.msra.mxu0 %v260
  %281 = vmatprep.subr.mxu0 0.0
  %282 = vmatpush1.msra.mxu0 %v261
  %283 = vmatprep.subr.mxu0 0.0
  %284 = vmatpush1.msra.mxu0 %v262
  %285 = vmatprep.subr.mxu0 0.0
  %286 = vmatpush1.msra.mxu0 %v263
  %287 = vmatprep.subr.mxu0 0.0
  %288 = vmatpush1.msra.mxu0 %v264
  %289 = vmatprep.subr.mxu0 0.0
  %290 = vmatpush1.msra.mxu0 %v265
  %291 = vmatprep.subr.mxu0 0.0
  %292 = vmatpush1.msra.mxu0 %v266
  %293 = vmatprep.subr.mxu0 0.0
  %294 = vmatpush1.msra.mxu0 %v267
  %295 = vmatprep.subr.mxu0 0.0
  %296 = vmatpush1.msra.mxu0 %v268
  %297 = vmatprep.subr.mxu0 0.0
  %298 = vmatpush1.msra.mxu0 %v269
  %299 = vmatprep.subr.mxu0 0.0
  %300 = vmatpush1.msra.mxu0 %v270
  %301 = vmatprep.subr.mxu0 0.0
  %302 = vmatpush1.msra.mxu0 %v271
  %303 = vmatprep.subr.mxu0 0.0
  %304 = vmatpush1.msra.mxu0 %v272
  %305 = vmatprep.subr.mxu0 0.0
  %306 = vmatpush1.msra.mxu0 0.0
  %307 = vmatprep.subr.mxu0 0.0
  %308 = vmatpush1.msra.mxu0 0.0
  %309 = vmatprep.subr.mxu0 0.0
  %310 = vmatpush1.msra.mxu0 0.0
  %311 = vmatprep.subr.mxu0 0.0
  %312 = vmatpush1.msra.mxu0 0.0
  %313 = vmatprep.subr.mxu0 0.0
  %314 = vmatpush1.msra.mxu0 0.0
  %315 = vmatprep.subr.mxu0 0.0
  %316 = vmatpush1.msra.mxu0 0.0
  %317 = vmatprep.subr.mxu0 0.0
  %318 = vmatpush1.msra.mxu0 0.0
  %319 = vmatprep.subr.mxu0 0.0
  %320 = vmatpush1.msra.mxu0 0.0
  %321 = vmatprep.subr.mxu0 0.0
  %322 = vmatpush1.msra.mxu0 0.0
  %323 = vmatprep.subr.mxu0 0.0
  %324 = vmatpush1.msra.mxu0 0.0
  %325 = vmatprep.subr.mxu0 0.0
  %326 = vmatpush1.msra.mxu0 0.0
  %327 = vmatprep.subr.mxu0 0.0
  %328 = vmatpush1.msra.mxu0 0.0
  %329 = vmatprep.subr.mxu0 0.0
  %330 = vmatpush1.msra.mxu0 0.0
  %331 = vmatprep.subr.mxu0 0.0
  %332 = vmatpush1.msra.mxu0 0.0
  %333 = vmatprep.subr.mxu0 0.0
  %334 = vmatpush1.msra.mxu0 0.0
  %335 = vmatprep.subr.mxu0 0.0
  %336 = vmatpush1.msra.mxu0 0.0
  %337 = vmatprep.mubr.f32.mxu0 0.0
  %338 = vmatmul.mubr.f32.gmra.mrb[0].mxu0 %v256
  %v339 = vpop.f32.mrb[0].mxu0
  %v340 = vadd.f32 0.0, %v339
  %v341 = vpop.f32.mrb[0].mxu0
  %342 = vdwg.mxu0
  %v343 = vld [vmem:[%s3] sm:$0x1]
  %v344 = vmul.f32 %v343, 0.17677669
  %v346 = vlaneseq
  %v347 = vshrl.u32 %v346, 7
  %v348 = vsub.s32 0, %v347
  %v349 = vrot.slane %v344, %v348
  %v351 = vadd.f32 %v349, %v340
  %v352 = vmul.f32 %v247, %v351
  %vm353 = vcmask 261120
  %v354 = vsel %vm353, %v352, 0.0
  %355 = vadd.xlane.f32.xlu0 %v354
  %v356 = vpop.xlane.xlu0 %355
  %s357 = sld [smem:[#allocation2]]
  %v358 = vstv %s357
  %v359 = vadd.f32 %v356, %v358
  %vm360 = vcmask 7168
  %361 = vst.msk [vmem:[%s7] sm:$0xff] %vm360, %v359
  // Predicated region
  $region30: #{tpu_custom_call.1} parent=0 // pred_check
    _
  $region31: #{tpu_custom_call.1} parent=0 // pred_check_branch
    %363 = sbr.rel (0) target = $region33
  $region32: #{tpu_custom_call.1} parent=0 // pred_region
    _
  $region33: #{tpu_custom_call.1} parent=0 // pred_fallthru
    _
  // Predicated region
  $region34: #{tpu_custom_call.1} parent=0 // pred_check
    _
  $region35: #{tpu_custom_call.1} parent=0 // pred_check_branch
    %365 = sbr.rel (0) target = $region37
  $region36: #{tpu_custom_call.1} parent=0 // pred_region
    _
  $region37: #{tpu_custom_call.1} parent=0 // pred_fallthru
    _

</llo_original>
